<compile_context>
chip_gen: v7x
topology: tpu7x:2x2x1
jax: 0.10.0
libtpu: 0.0.40
codegen_flags: <defaults>
</compile_context>

<pallas_src>
import math

import jax
import jax.numpy as jnp
from jax.experimental import pallas as pl
from jax.experimental.pallas import tpu as pltpu


def _linear_kernel(x_ref, w_ref, b_ref, o_ref):
    # x_ref: (TM, K) f32 tile  -> cast to bf16 in-kernel (hidden under DMA)
    # w_ref: (K, N)  bf16, resident across grid steps
    # b_ref: (1, N)  f32, resident
    # o_ref: (TM, N) f32
    acc = jnp.dot(
        x_ref[...].astype(jnp.bfloat16),
        w_ref[...],
        preferred_element_type=jnp.float32,
    )
    o_ref[...] = (acc + b_ref[...]).astype(o_ref.dtype)


def _pick_tm(batch, tm):
    """Rows per grid step: multiple of 8 (or == batch), >= 2 steps when it helps."""
    if batch <= 8:
        return batch  # single tile; block dim == full array dim is legal
    half = -(-batch // 2)              # ceil(batch / 2)
    half_rounded = -(-half // 8) * 8   # round up to a multiple of 8
    return min(tm, half_rounded)       # guarantees >= 2 grid steps (v7x megacore)


def simple_model_forward(x, w, b, *, tm=1024):
    """SimpleModel forward: y = x.view(B, -1) @ W + b.

    x: (B, 1, 28, 28) f32;  w: (784, 10) f32 (transposed torch weight);
    b: (10,) f32.  Returns (B, 10) in x.dtype.
    """
    B = x.shape[0]
    in_features, out_features = w.shape
    x_flat = x.reshape(B, -1).astype(jnp.float32)
    assert x_flat.shape[1] == in_features, "expected W transposed to (in, out)"

    # W is tiny (784x10) and stays resident; cast once per call is negligible.
    w_bf16 = w.astype(jnp.bfloat16)
    b_row = b.astype(jnp.float32).reshape(1, out_features)

    tm_eff = _pick_tm(B, tm)
    grid = (pl.cdiv(B, tm_eff),)
    # Note: when B % tm_eff != 0 the final grid step has a partial block; there
    # is no cross-row accumulation, and Pallas clips the out-of-bounds output
    # rows, so garbage rows in the padded x tile cannot contaminate results
    # (exercised by the B=40 check below).

    out = pl.pallas_call(
        _linear_kernel,
        out_shape=jax.ShapeDtypeStruct((B, out_features), jnp.float32),
        grid_spec=pltpu.PrefetchScalarGridSpec(
            num_scalar_prefetch=0,
            grid=grid,
            in_specs=[
                pl.BlockSpec((tm_eff, in_features), lambda i: (i, 0)),        # x tile (f32)
                pl.BlockSpec((in_features, out_features), lambda i: (0, 0)),  # W resident
                pl.BlockSpec((1, out_features), lambda i: (0, 0)),            # b resident
            ],
            out_specs=pl.BlockSpec((tm_eff, out_features), lambda i: (i, 0)),
        ),
        compiler_params=pltpu.CompilerParams(
            dimension_semantics=("parallel",),
        ),
    )(x_flat, w_bf16, b_row)

    return out.astype(x.dtype)


def _reference_bf16(x, w, b):
    B = x.shape[0]
    x_flat = x.reshape(B, -1)
    return (
        jnp.dot(
            x_flat.astype(jnp.bfloat16),
            w.astype(jnp.bfloat16),
            preferred_element_type=jnp.float32,
        )
        + b
    )


if __name__ == "__main__":
    key = jax.random.PRNGKey(0)
    kx, kw, kb, kx2 = jax.random.split(key, 4)

    B, C, H, W = 2, 1, 28, 28
    in_features, out_features = C * H * W, 10

    # Deterministic parameter init mimicking torch nn.Linear
    # (U[-1/sqrt(fan_in), 1/sqrt(fan_in)]).
    bound = 1.0 / math.sqrt(in_features)
    w = jax.random.uniform(
        kw, (in_features, out_features), jnp.float32, -bound, bound
    )
    b = jax.random.uniform(kb, (out_features,), jnp.float32, -bound, bound)

    x = jax.random.normal(kx, (B, C, H, W), jnp.float32)

    out = simple_model_forward(x, w, b)
    jax.block_until_ready(out)
    assert out.shape == (B, out_features)

    # Same-precision reference (bf16 MXU inputs, f32 accumulation) — tight tol.
    ref_bf16 = _reference_bf16(x, w, b)
    assert jnp.allclose(out, ref_bf16, atol=1e-5, rtol=1e-5)

    # Full-precision reference (loose tolerance for bf16 quantization).
    ref_f32 = x.reshape(B, -1) @ w + b
    assert jnp.allclose(out, ref_f32, atol=2e-2, rtol=2e-2)

    # Secondary check: multi-step grid with a partial final block
    # (B=40 -> tm=24 -> grid=2, last block has 16 valid rows).
    B2 = 40
    x2 = jax.random.normal(kx2, (B2, C, H, W), jnp.float32)
    out2 = simple_model_forward(x2, w, b)
    jax.block_until_ready(out2)
    assert out2.shape == (B2, out_features)
    assert jnp.allclose(out2, _reference_bf16(x2, w, b), atol=1e-5, rtol=1e-5)

    print("KERNEL_OK")
</pallas_src>

<mosaic_0001>
module attributes {stable_mosaic.version = 11 : i64} {
  func.func @_linear_kernel(%arg0: i32, %arg1: memref<2x784xf32, #tpu.memory_space<vmem>>, %arg2: memref<784x10xbf16, #tpu.memory_space<vmem>>, %arg3: memref<1x10xf32, #tpu.memory_space<vmem>>, %arg4: memref<2x10xf32, #tpu.memory_space<vmem>>) attributes {dimension_semantics = [#tpu.dimension_semantics<parallel>], iteration_bounds = array<i64: 1>, scalar_prefetch = 0 : i64, scratch_operands = 0 : i64, tpu.core_type = #tpu.core_type<tc>, window_params = [{transform_indices = @transform_0, window_bounds = array<i64: 2, 784>}, {pipeline_mode = #tpu.pipeline_mode<synchronous>, transform_indices = @transform_1, window_bounds = array<i64: 784, 10>}, {pipeline_mode = #tpu.pipeline_mode<synchronous>, transform_indices = @transform_2, window_bounds = array<i64: 1, 10>}, {transform_indices = @transform_3, window_bounds = array<i64: 2, 10>}]} {
    %c0 = arith.constant 0 : index
    %c0_0 = arith.constant 0 : index
    %0 = vector.load %arg1[%c0, %c0_0] : memref<2x784xf32, #tpu.memory_space<vmem>>, vector<2x784xf32>
    %1 = arith.truncf %0 : vector<2x784xf32> to vector<2x784xbf16>
    %c0_1 = arith.constant 0 : index
    %c0_2 = arith.constant 0 : index
    %2 = vector.load %arg2[%c0_1, %c0_2] : memref<784x10xbf16, #tpu.memory_space<vmem>>, vector<784x10xbf16>
    %cst = arith.constant dense<0.000000e+00> : vector<2x10xf32>
    %3 = tpu.matmul %1, %2, %cst {dimension_numbers = #tpu.dot_dimension_numbers<[1], [0], [0], [1], [0, 0, 1, 1], [], []>} : vector<2x784xbf16>, vector<784x10xbf16>, vector<2x10xf32> -> vector<2x10xf32>
    %c0_3 = arith.constant 0 : index
    %c0_4 = arith.constant 0 : index
    %4 = vector.load %arg3[%c0_3, %c0_4] : memref<1x10xf32, #tpu.memory_space<vmem>>, vector<1x10xf32>
    %5 = vector.broadcast %4 : vector<1x10xf32> to vector<2x10xf32>
    %6 = arith.addf %3, %5 : vector<2x10xf32>
    %c0_5 = arith.constant 0 : index
    %c0_6 = arith.constant 0 : index
    %7 = vector.load %arg4[%c0_5, %c0_6] : memref<2x10xf32, #tpu.memory_space<vmem>>, vector<2x10xf32>
    tpu.vector_store %arg4[%c0_5, %c0_6], %6 {strides = array<i32>} : memref<2x10xf32, #tpu.memory_space<vmem>>, vector<2x10xf32>,
    return
  }
  func.func @transform_0(%arg0: i32) -> (i32, i32) {
    %c0_i32 = arith.constant 0 : i32
    %c0_i32_0 = arith.constant 0 : i32
    return %arg0, %c0_i32 : i32, i32
  }
  func.func @transform_1(%arg0: i32) -> (i32, i32) {
    %c0_i32 = arith.constant 0 : i32
    %c0_i32_0 = arith.constant 0 : i32
    %c0_i32_1 = arith.constant 0 : i32
    return %c0_i32, %c0_i32_0 : i32, i32
  }
  func.func @transform_2(%arg0: i32) -> (i32, i32) {
    %c0_i32 = arith.constant 0 : i32
    %c0_i32_0 = arith.constant 0 : i32
    %c0_i32_1 = arith.constant 0 : i32
    return %c0_i32, %c0_i32_0 : i32, i32
  }
  func.func @transform_3(%arg0: i32) -> (i32, i32) {
    %c0_i32 = arith.constant 0 : i32
    %c0_i32_0 = arith.constant 0 : i32
    return %arg0, %c0_i32 : i32, i32
  }
}

</mosaic_0001>

<llo_original>
// kernel: tpu_custom_call.1
$region0: #{tpu_custom_call.1}
  #allocation0 [shape = 'u32[]', space=smem, size = 0x4, offset = 0x4, fixed_abs, tag = 'smem constant byte address 0x4 - core index']
  #allocation1 [shape = 'u32[144,128]{1,0:T(1,128)}', space=vmem, size = 0x12000, scoped, tag = 'internal scratch']
  %s0 = inlined_call_operand.vmem [shape: f32[2,784], index: 0, kind: input, shape index: {}]
  %s1 = inlined_call_operand.vmem [shape: bf16[784,10], index: 1, kind: input, shape index: {}]
  %s2 = inlined_call_operand.vmem [shape: f32[1,10], index: 2, kind: input, shape index: {}]
  %s3 = inlined_call_operand.hbm [shape: f32[2,10], index: 3, kind: output, shape index: {}]
  %s4 = sld [smem:[#allocation0]]
  $region22: #{tpu_custom_call.1} parent=0
    _
  %s6 = ssub.s32 1, %s4
  %s7 = scalar_select 0, %s6, %s4
  $region1: #{tpu_custom_call.1} parent=0
    #allocation2 [shape = 'u8[1024]{0}', space=vmem, size = 0x400, scoped, tag = 'output window, operand 0, single buffered']
    #allocation3 [shape = 's32[1]{0}', space=sflag, size = 0x4, scoped, tag = 'scoped memory for tpu_custom_call.1']
    %8 = vsyncpa [#allocation3], 0
    // Predicated region
    $region2: #{tpu_custom_call.1} parent=1 // pred_check
      _
    $region3: #{tpu_custom_call.1} parent=1 // pred_check_branch
      %10 = sbr.rel (0) target = $region5
    $region4: #{tpu_custom_call.1} parent=1 // pred_region
      _
    $region5: #{tpu_custom_call.1} parent=1 // pred_fallthru
      _
    // Predicated region
    $region6: #{tpu_custom_call.1} parent=1 // pred_check
      _
    $region7: #{tpu_custom_call.1} parent=1 // pred_check_branch
      %12 = sbr.rel (0) target = $region9
    $region8: #{tpu_custom_call.1} parent=1 // pred_region
      _
    $region9: #{tpu_custom_call.1} parent=1 // pred_fallthru
      _
    // Predicated region
    $region10: #{tpu_custom_call.1} parent=1 // pred_check
      _
    $region11: #{tpu_custom_call.1} parent=1 // pred_check_branch
      %14 = sbr.rel (0) target = $region13
    $region12: #{tpu_custom_call.1} parent=1 // pred_region
      _
    $region13: #{tpu_custom_call.1} parent=1 // pred_fallthru
      _
    %v16 = vld [vmem:[%s0] sm:$0xff]
    %v17 = vld [vmem:[%s0 + $0x8] sm:$0x3f]
    %v20 = vcombine.high %v16, %v16
    %v22 = vunpack.c.l.s4 1983009808
    %v23 = vunpack.c.0.s8 %v22
    %v24 = vlaneseq
    %v25 = vshrl.u32 %v24, 7
    %v26 = vsub.s32 %v23, %v25
    %v27 = vrot.slane %v16, %v26
    %v29 = vunpack.c.l.s4 1983009808
    %v30 = vunpack.c.0.s8 %v29
    %v31 = vlaneseq
    %v32 = vshrl.u32 %v31, 7
    %v33 = vsub.s32 %v30, %v32
    %v34 = vrot.slane %v20, %v33
    %v35 = vcombine.high %v27, %v27
    %v36 = vcombine.high %v34, %v34
    %v37 = vcombine.high %v17, %v17
    %v39 = vunpack.c.l.s4 1983009808
    %v40 = vunpack.c.0.s8 %v39
    %v41 = vlaneseq
    %v42 = vshrl.u32 %v41, 7
    %v43 = vsub.s32 %v40, %v42
    %v44 = vrot.slane %v17, %v43
    %v46 = vunpack.c.l.s4 1983009808
    %v47 = vunpack.c.0.s8 %v46
    %v48 = vlaneseq
    %v49 = vshrl.u32 %v48, 7
    %v50 = vsub.s32 %v47, %v49
    %v51 = vrot.slane %v37, %v50
    %v52 = vcombine.high %v44, %v44
    %v60 = vpack.c.bf16 %v27, %v27
    %v61 = vpack.c.bf16 %v35, %v35
    %v62 = vpack.c.bf16 %v34, %v34
    %v63 = vpack.c.bf16 %v36, %v36
    %v64 = vpack.c.bf16 %v44, %v44
    %v65 = vpack.c.bf16 %v52, %v52
    %v66 = vpack.c.bf16 %v51, %v51
    %v67 = vld [vmem:[%s1] sm:$0xf]
    %v68 = vld [vmem:[%s1 + $0x4] sm:$0xf]
    %v69 = vld [vmem:[%s1 + $0x8] sm:$0xf]
    %v70 = vld [vmem:[%s1 + $0xc] sm:$0xf]
    %v71 = vld [vmem:[%s1 + $0x10] sm:$0xf]
    %v72 = vld [vmem:[%s1 + $0x14] sm:$0xf]
    %v73 = vld [vmem:[%s1 + $0x18] sm:$0xf]
    %v74 = vld [vmem:[%s1 + $0x1c] sm:$0xf]
    %v75 = vld [vmem:[%s1 + $0x20] sm:$0xf]
    %v76 = vld [vmem:[%s1 + $0x24] sm:$0xf]
    %v77 = vld [vmem:[%s1 + $0x28] sm:$0xf]
    %v78 = vld [vmem:[%s1 + $0x2c] sm:$0xf]
    %v79 = vld [vmem:[%s1 + $0x30] sm:$0xf]
    %v80 = vld [vmem:[%s1 + $0x34] sm:$0xf]
    %v81 = vld [vmem:[%s1 + $0x38] sm:$0xf]
    %v82 = vld [vmem:[%s1 + $0x3c] sm:$0xf]
    %v83 = vld [vmem:[%s1 + $0x40] sm:$0xf]
    %v84 = vld [vmem:[%s1 + $0x44] sm:$0xf]
    %v85 = vld [vmem:[%s1 + $0x48] sm:$0xf]
    %v86 = vld [vmem:[%s1 + $0x4c] sm:$0xf]
    %v87 = vld [vmem:[%s1 + $0x50] sm:$0xf]
    %v88 = vld [vmem:[%s1 + $0x54] sm:$0xf]
    %v89 = vld [vmem:[%s1 + $0x58] sm:$0xf]
    %v90 = vld [vmem:[%s1 + $0x5c] sm:$0xf]
    %v91 = vld [vmem:[%s1 + $0x60] sm:$0xf]
    %v92 = vld [vmem:[%s1 + $0x64] sm:$0xf]
    %v93 = vld [vmem:[%s1 + $0x68] sm:$0xf]
    %v94 = vld [vmem:[%s1 + $0x6c] sm:$0xf]
    %v95 = vld [vmem:[%s1 + $0x70] sm:$0xf]
    %v96 = vld [vmem:[%s1 + $0x74] sm:$0xf]
    %v97 = vld [vmem:[%s1 + $0x78] sm:$0xf]
    %v98 = vld [vmem:[%s1 + $0x7c] sm:$0xf]
    %v99 = vld [vmem:[%s1 + $0x80] sm:$0xf]
    %v100 = vld [vmem:[%s1 + $0x84] sm:$0xf]
    %v101 = vld [vmem:[%s1 + $0x88] sm:$0xf]
    %v102 = vld [vmem:[%s1 + $0x8c] sm:$0xf]
    %v103 = vld [vmem:[%s1 + $0x90] sm:$0xf]
    %v104 = vld [vmem:[%s1 + $0x94] sm:$0xf]
    %v105 = vld [vmem:[%s1 + $0x98] sm:$0xf]
    %v106 = vld [vmem:[%s1 + $0x9c] sm:$0xf]
    %v107 = vld [vmem:[%s1 + $0xa0] sm:$0xf]
    %v108 = vld [vmem:[%s1 + $0xa4] sm:$0xf]
    %v109 = vld [vmem:[%s1 + $0xa8] sm:$0xf]
    %v110 = vld [vmem:[%s1 + $0xac] sm:$0xf]
    %v111 = vld [vmem:[%s1 + $0xb0] sm:$0xf]
    %v112 = vld [vmem:[%s1 + $0xb4] sm:$0xf]
    %v113 = vld [vmem:[%s1 + $0xb8] sm:$0xf]
    %v114 = vld [vmem:[%s1 + $0xbc] sm:$0xf]
    %v115 = vld [vmem:[%s1 + $0xc0] sm:$0xf]
    %v116 = vld [vmem:[%s1 + $0xc4] sm:$0xf]
    %v117 = vld [vmem:[%s1 + $0xc8] sm:$0xf]
    %v118 = vld [vmem:[%s1 + $0xcc] sm:$0xf]
    %v119 = vld [vmem:[%s1 + $0xd0] sm:$0xf]
    %v120 = vld [vmem:[%s1 + $0xd4] sm:$0xf]
    %v121 = vld [vmem:[%s1 + $0xd8] sm:$0xf]
    %v122 = vld [vmem:[%s1 + $0xdc] sm:$0xf]
    %v123 = vld [vmem:[%s1 + $0xe0] sm:$0xf]
    %v124 = vld [vmem:[%s1 + $0xe4] sm:$0xf]
    %v125 = vld [vmem:[%s1 + $0xe8] sm:$0xf]
    %v126 = vld [vmem:[%s1 + $0xec] sm:$0xf]
    %v127 = vld [vmem:[%s1 + $0xf0] sm:$0xf]
    %v128 = vld [vmem:[%s1 + $0xf4] sm:$0xf]
    %v129 = vld [vmem:[%s1 + $0xf8] sm:$0xf]
    %v130 = vld [vmem:[%s1 + $0xfc] sm:$0xf]
    %v131 = vld [vmem:[%s1 + $0x100] sm:$0xf]
    %v132 = vld [vmem:[%s1 + $0x104] sm:$0xf]
    %v133 = vld [vmem:[%s1 + $0x108] sm:$0xf]
    %v134 = vld [vmem:[%s1 + $0x10c] sm:$0xf]
    %v135 = vld [vmem:[%s1 + $0x110] sm:$0xf]
    %v136 = vld [vmem:[%s1 + $0x114] sm:$0xf]
    %v137 = vld [vmem:[%s1 + $0x118] sm:$0xf]
    %v138 = vld [vmem:[%s1 + $0x11c] sm:$0xf]
    %v139 = vld [vmem:[%s1 + $0x120] sm:$0xf]
    %v140 = vld [vmem:[%s1 + $0x124] sm:$0xf]
    %v141 = vld [vmem:[%s1 + $0x128] sm:$0xf]
    %v142 = vld [vmem:[%s1 + $0x12c] sm:$0xf]
    %v143 = vld [vmem:[%s1 + $0x130] sm:$0xf]
    %v144 = vld [vmem:[%s1 + $0x134] sm:$0xf]
    %v145 = vld [vmem:[%s1 + $0x138] sm:$0xf]
    %v146 = vld [vmem:[%s1 + $0x13c] sm:$0xf]
    %v147 = vld [vmem:[%s1 + $0x140] sm:$0xf]
    %v148 = vld [vmem:[%s1 + $0x144] sm:$0xf]
    %v149 = vld [vmem:[%s1 + $0x148] sm:$0xf]
    %v150 = vld [vmem:[%s1 + $0x14c] sm:$0xf]
    %v151 = vld [vmem:[%s1 + $0x150] sm:$0xf]
    %v152 = vld [vmem:[%s1 + $0x154] sm:$0xf]
    %v153 = vld [vmem:[%s1 + $0x158] sm:$0xf]
    %v154 = vld [vmem:[%s1 + $0x15c] sm:$0xf]
    %v155 = vld [vmem:[%s1 + $0x160] sm:$0xf]
    %v156 = vld [vmem:[%s1 + $0x164] sm:$0xf]
    %v157 = vld [vmem:[%s1 + $0x168] sm:$0xf]
    %v158 = vld [vmem:[%s1 + $0x16c] sm:$0xf]
    %v159 = vld [vmem:[%s1 + $0x170] sm:$0xf]
    %v160 = vld [vmem:[%s1 + $0x174] sm:$0xf]
    %v161 = vld [vmem:[%s1 + $0x178] sm:$0xf]
    %v162 = vld [vmem:[%s1 + $0x17c] sm:$0xf]
    %v163 = vld [vmem:[%s1 + $0x180] sm:$0xf]
    %v164 = vld [vmem:[%s1 + $0x184] sm:$0xf]
    %v165 = vld [vmem:[%s2] sm:$0x1]
    %v167 = vlaneseq
    %v168 = vshrl.u32 %v167, 7
    %v169 = vsub.s32 0, %v168
    %v170 = vrot.slane %v165, %v169
    %v270 = vunpack.c.l.b16 %v67
    %v271 = vunpack.c.l.b16 %v68
    %v272 = vunpack.c.l.b16 %v69
    %v273 = vunpack.c.l.b16 %v70
    %v274 = vunpack.c.l.b16 %v71
    %v275 = vunpack.c.l.b16 %v72
    %v276 = vunpack.c.l.b16 %v73
    %v277 = vunpack.c.l.b16 %v74
    %v278 = vunpack.c.l.b16 %v75
    %v279 = vunpack.c.l.b16 %v76
    %v280 = vunpack.c.l.b16 %v77
    %v281 = vunpack.c.l.b16 %v78
    %v282 = vunpack.c.l.b16 %v79
    %v283 = vunpack.c.l.b16 %v80
    %v284 = vunpack.c.l.b16 %v81
    %v285 = vunpack.c.l.b16 %v82
    %v286 = vunpack.c.l.b16 %v83
    %v287 = vunpack.c.l.b16 %v84
    %v288 = vunpack.c.l.b16 %v85
    %v289 = vunpack.c.l.b16 %v86
    %v290 = vunpack.c.l.b16 %v87
    %v291 = vunpack.c.l.b16 %v88
    %v292 = vunpack.c.l.b16 %v89
    %v293 = vunpack.c.l.b16 %v90
    %v294 = vunpack.c.l.b16 %v91
    %v295 = vunpack.c.l.b16 %v92
    %v296 = vunpack.c.l.b16 %v93
    %v297 = vunpack.c.l.b16 %v94
    %v298 = vunpack.c.l.b16 %v95
    %v299 = vunpack.c.l.b16 %v96
    %v300 = vunpack.c.l.b16 %v97
    %v301 = vunpack.c.l.b16 %v98
    %v302 = vunpack.c.l.b16 %v99
    %v303 = vunpack.c.l.b16 %v100
    %v304 = vunpack.c.l.b16 %v101
    %v305 = vunpack.c.l.b16 %v102
    %v306 = vunpack.c.l.b16 %v103
    %v307 = vunpack.c.l.b16 %v104
    %v308 = vunpack.c.l.b16 %v105
    %v309 = vunpack.c.l.b16 %v106
    %v310 = vunpack.c.l.b16 %v107
    %v311 = vunpack.c.l.b16 %v108
    %v312 = vunpack.c.l.b16 %v109
    %v313 = vunpack.c.l.b16 %v110
    %v314 = vunpack.c.l.b16 %v111
    %v315 = vunpack.c.l.b16 %v112
    %v316 = vunpack.c.l.b16 %v113
    %v317 = vunpack.c.l.b16 %v114
    %v318 = vunpack.c.l.b16 %v115
    %v319 = vunpack.c.l.b16 %v116
    %v320 = vunpack.c.l.b16 %v117
    %v321 = vunpack.c.l.b16 %v118
    %v322 = vunpack.c.l.b16 %v119
    %v323 = vunpack.c.l.b16 %v120
    %v324 = vunpack.c.l.b16 %v121
    %v325 = vunpack.c.l.b16 %v122
    %v326 = vunpack.c.l.b16 %v123
    %v327 = vunpack.c.l.b16 %v124
    %v328 = vunpack.c.l.b16 %v125
    %v329 = vunpack.c.l.b16 %v126
    %v330 = vunpack.c.l.b16 %v127
    %v331 = vunpack.c.l.b16 %v128
    %v332 = vunpack.c.l.b16 %v129
    %v333 = vunpack.c.l.b16 %v130
    %v334 = vunpack.c.l.b16 %v131
    %v335 = vunpack.c.l.b16 %v132
    %v336 = vunpack.c.l.b16 %v133
    %v337 = vunpack.c.l.b16 %v134
    %v338 = vunpack.c.l.b16 %v135
    %v339 = vunpack.c.l.b16 %v136
    %v340 = vunpack.c.l.b16 %v137
    %v341 = vunpack.c.l.b16 %v138
    %v342 = vunpack.c.l.b16 %v139
    %v343 = vunpack.c.l.b16 %v140
    %v344 = vunpack.c.l.b16 %v141
    %v345 = vunpack.c.l.b16 %v142
    %v346 = vunpack.c.l.b16 %v143
    %v347 = vunpack.c.l.b16 %v144
    %v348 = vunpack.c.l.b16 %v145
    %v349 = vunpack.c.l.b16 %v146
    %v350 = vunpack.c.l.b16 %v147
    %v351 = vunpack.c.l.b16 %v148
    %v352 = vunpack.c.l.b16 %v149
    %v353 = vunpack.c.l.b16 %v150
    %v354 = vunpack.c.l.b16 %v151
    %v355 = vunpack.c.l.b16 %v152
    %v356 = vunpack.c.l.b16 %v153
    %v357 = vunpack.c.l.b16 %v154
    %v358 = vunpack.c.l.b16 %v155
    %v359 = vunpack.c.l.b16 %v156
    %v360 = vunpack.c.l.b16 %v157
    %v361 = vunpack.c.l.b16 %v158
    %v362 = vunpack.c.l.b16 %v159
    %v363 = vunpack.c.l.b16 %v160
    %v364 = vunpack.c.l.b16 %v161
    %v365 = vunpack.c.l.b16 %v162
    %v366 = vunpack.c.l.b16 %v163
    %v367 = vunpack.c.l.b16 %v164
    %v368 = vpack.c.b16 %v271, %v270
    %v369 = vpack.c.b16 %v273, %v272
    %v370 = vpack.c.b16 %v275, %v274
    %v371 = vpack.c.b16 %v277, %v276
    %v372 = vpack.c.b16 %v279, %v278
    %v373 = vpack.c.b16 %v281, %v280
    %v374 = vpack.c.b16 %v283, %v282
    %v375 = vpack.c.b16 %v285, %v284
    %v376 = vpack.c.b16 %v287, %v286
    %v377 = vpack.c.b16 %v289, %v288
    %v378 = vpack.c.b16 %v291, %v290
    %v379 = vpack.c.b16 %v293, %v292
    %v380 = vpack.c.b16 %v295, %v294
    %v381 = vpack.c.b16 %v297, %v296
    %v382 = vpack.c.b16 %v299, %v298
    %v383 = vpack.c.b16 %v301, %v300
    %v384 = vpack.c.b16 %v303, %v302
    %v385 = vpack.c.b16 %v305, %v304
    %v386 = vpack.c.b16 %v307, %v306
    %v387 = vpack.c.b16 %v309, %v308
    %v388 = vpack.c.b16 %v311, %v310
    %v389 = vpack.c.b16 %v313, %v312
    %v390 = vpack.c.b16 %v315, %v314
    %v391 = vpack.c.b16 %v317, %v316
    %v392 = vpack.c.b16 %v319, %v318
    %v393 = vpack.c.b16 %v321, %v320
    %v394 = vpack.c.b16 %v323, %v322
    %v395 = vpack.c.b16 %v325, %v324
    %v396 = vpack.c.b16 %v327, %v326
    %v397 = vpack.c.b16 %v329, %v328
    %v398 = vpack.c.b16 %v331, %v330
    %v399 = vpack.c.b16 %v333, %v332
    %v400 = vpack.c.b16 %v335, %v334
    %v401 = vpack.c.b16 %v337, %v336
    %v402 = vpack.c.b16 %v339, %v338
    %v403 = vpack.c.b16 %v341, %v340
    %v404 = vpack.c.b16 %v343, %v342
    %v405 = vpack.c.b16 %v345, %v344
    %v406 = vpack.c.b16 %v347, %v346
    %v407 = vpack.c.b16 %v349, %v348
    %v408 = vpack.c.b16 %v351, %v350
    %v409 = vpack.c.b16 %v353, %v352
    %v410 = vpack.c.b16 %v355, %v354
    %v411 = vpack.c.b16 %v357, %v356
    %v412 = vpack.c.b16 %v359, %v358
    %v413 = vpack.c.b16 %v361, %v360
    %v414 = vpack.c.b16 %v363, %v362
    %v415 = vpack.c.b16 %v365, %v364
    %v416 = vpack.c.b16 %v367, %v366
    %vm466 = vcmask 130048
    %v468 = vsel %vm466, %v66, 0
    %470 = vmatprep.subr.bf16.mxu0 0
    %471 = vmatpush1.bf16.msra.mxu0 %v368
    %472 = vmatprep.subr.bf16.mxu0 0
    %473 = vmatpush1.bf16.msra.mxu0 %v369
    %474 = vmatprep.subr.bf16.mxu0 0
    %475 = vmatpush1.bf16.msra.mxu0 %v370
    %476 = vmatprep.subr.bf16.mxu0 0
    %477 = vmatpush1.bf16.msra.mxu0 %v371
    %478 = vmatprep.subr.bf16.mxu0 0
    %479 = vmatpush1.bf16.msra.mxu0 %v372
    %480 = vmatprep.subr.bf16.mxu0 0
    %481 = vmatpush1.bf16.msra.mxu0 %v373
    %482 = vmatprep.subr.bf16.mxu0 0
    %483 = vmatpush1.bf16.msra.mxu0 %v374
    %484 = vmatprep.subr.bf16.mxu0 0
    %485 = vmatpush1.bf16.msra.mxu0 %v375
    %486 = vmatprep.subr.bf16.mxu0 0
    %487 = vmatpush1.bf16.msra.mxu0 %v376
    %488 = vmatprep.subr.bf16.mxu0 0
    %489 = vmatpush1.bf16.msra.mxu0 %v377
    %490 = vmatprep.subr.bf16.mxu0 0
    %491 = vmatpush1.bf16.msra.mxu0 %v378
    %492 = vmatprep.subr.bf16.mxu0 0
    %493 = vmatpush1.bf16.msra.mxu0 %v379
    %494 = vmatprep.subr.bf16.mxu0 0
    %495 = vmatpush1.bf16.msra.mxu0 %v380
    %496 = vmatprep.subr.bf16.mxu0 0
    %497 = vmatpush1.bf16.msra.mxu0 %v381
    %498 = vmatprep.subr.bf16.mxu0 0
    %499 = vmatpush1.bf16.msra.mxu0 %v382
    %500 = vmatprep.subr.bf16.mxu0 0
    %501 = vmatpush1.bf16.msra.mxu0 %v383
    %502 = vmatprep.mubr.bf16.mxu0 %v61
    %503 = vmatmul.mubr.bf16.gmra.mrb[0].mxu0 %v60
    %v504 = vpop.f32.mrb[0].mxu0
    %v505 = vadd.f32 %v170, %v504
    %v506 = vpop.f32.mrb[0].mxu0
    %v507 = vpop.f32.mrb[0].mxu0
    %v508 = vpop.f32.mrb[0].mxu0
    %509 = vdwg.mxu0
    %510 = vmatprep.subr.bf16.mxu0 0
    %511 = vmatpush1.bf16.msra.mxu0 %v384
    %512 = vmatprep.subr.bf16.mxu0 0
    %513 = vmatpush1.bf16.msra.mxu0 %v385
    %514 = vmatprep.subr.bf16.mxu0 0
    %515 = vmatpush1.bf16.msra.mxu0 %v386
    %516 = vmatprep.subr.bf16.mxu0 0
    %517 = vmatpush1.bf16.msra.mxu0 %v387
    %518 = vmatprep.subr.bf16.mxu0 0
    %519 = vmatpush1.bf16.msra.mxu0 %v388
    %520 = vmatprep.subr.bf16.mxu0 0
    %521 = vmatpush1.bf16.msra.mxu0 %v389
    %522 = vmatprep.subr.bf16.mxu0 0
    %523 = vmatpush1.bf16.msra.mxu0 %v390
    %524 = vmatprep.subr.bf16.mxu0 0
    %525 = vmatpush1.bf16.msra.mxu0 %v391
    %526 = vmatprep.subr.bf16.mxu0 0
    %527 = vmatpush1.bf16.msra.mxu0 %v392
    %528 = vmatprep.subr.bf16.mxu0 0
    %529 = vmatpush1.bf16.msra.mxu0 %v393
    %530 = vmatprep.subr.bf16.mxu0 0
    %531 = vmatpush1.bf16.msra.mxu0 %v394
    %532 = vmatprep.subr.bf16.mxu0 0
    %533 = vmatpush1.bf16.msra.mxu0 %v395
    %534 = vmatprep.subr.bf16.mxu0 0
    %535 = vmatpush1.bf16.msra.mxu0 %v396
    %536 = vmatprep.subr.bf16.mxu0 0
    %537 = vmatpush1.bf16.msra.mxu0 %v397
    %538 = vmatprep.subr.bf16.mxu0 0
    %539 = vmatpush1.bf16.msra.mxu0 %v398
    %540 = vmatprep.subr.bf16.mxu0 0
    %541 = vmatpush1.bf16.msra.mxu0 %v399
    %542 = vmatprep.mubr.bf16.mxu0 %v63
    %543 = vmatmul.mubr.bf16.gmra.mrb[0].mxu0 %v62
    %v544 = vpop.f32.mrb[0].mxu0
    %v545 = vadd.f32 %v505, %v544
    %v546 = vpop.f32.mrb[0].mxu0
    %v547 = vpop.f32.mrb[0].mxu0
    %v548 = vpop.f32.mrb[0].mxu0
    %549 = vdwg.mxu0
    %550 = vmatprep.subr.bf16.mxu0 0
    %551 = vmatpush1.bf16.msra.mxu0 %v400
    %552 = vmatprep.subr.bf16.mxu0 0
    %553 = vmatpush1.bf16.msra.mxu0 %v401
    %554 = vmatprep.subr.bf16.mxu0 0
    %555 = vmatpush1.bf16.msra.mxu0 %v402
    %556 = vmatprep.subr.bf16.mxu0 0
    %557 = vmatpush1.bf16.msra.mxu0 %v403
    %558 = vmatprep.subr.bf16.mxu0 0
    %559 = vmatpush1.bf16.msra.mxu0 %v404
    %560 = vmatprep.subr.bf16.mxu0 0
    %561 = vmatpush1.bf16.msra.mxu0 %v405
    %562 = vmatprep.subr.bf16.mxu0 0
    %563 = vmatpush1.bf16.msra.mxu0 %v406
    %564 = vmatprep.subr.bf16.mxu0 0
    %565 = vmatpush1.bf16.msra.mxu0 %v407
    %566 = vmatprep.subr.bf16.mxu0 0
    %567 = vmatpush1.bf16.msra.mxu0 %v408
    %568 = vmatprep.subr.bf16.mxu0 0
    %569 = vmatpush1.bf16.msra.mxu0 %v409
    %570 = vmatprep.subr.bf16.mxu0 0
    %571 = vmatpush1.bf16.msra.mxu0 %v410
    %572 = vmatprep.subr.bf16.mxu0 0
    %573 = vmatpush1.bf16.msra.mxu0 %v411
    %574 = vmatprep.subr.bf16.mxu0 0
    %575 = vmatpush1.bf16.msra.mxu0 %v412
    %576 = vmatprep.subr.bf16.mxu0 0
    %577 = vmatpush1.bf16.msra.mxu0 %v413
    %578 = vmatprep.subr.bf16.mxu0 0
    %579 = vmatpush1.bf16.msra.mxu0 %v414
    %580 = vmatprep.subr.bf16.mxu0 0
    %581 = vmatpush1.bf16.msra.mxu0 %v415
    %582 = vmatprep.mubr.bf16.mxu0 %v65
    %583 = vmatmul.mubr.bf16.gmra.mrb[0].mxu0 %v64
    %v584 = vpop.f32.mrb[0].mxu0
    %v585 = vadd.f32 %v545, %v584
    %v586 = vpop.f32.mrb[0].mxu0
    %v587 = vpop.f32.mrb[0].mxu0
    %v588 = vpop.f32.mrb[0].mxu0
    %589 = vdwg.mxu0
    %590 = vmatprep.subr.bf16.mxu0 0
    %591 = vmatpush1.bf16.msra.mxu0 %v416
    %592 = vmatprep.subr.bf16.mxu0 0
    %593 = vmatpush1.bf16.msra.mxu0 0
    %594 = vmatprep.subr.bf16.mxu0 0
    %595 = vmatpush1.bf16.msra.mxu0 0
    %596 = vmatprep.subr.bf16.mxu0 0
    %597 = vmatpush1.bf16.msra.mxu0 0
    %598 = vmatprep.subr.bf16.mxu0 0
    %599 = vmatpush1.bf16.msra.mxu0 0
    %600 = vmatprep.subr.bf16.mxu0 0
    %601 = vmatpush1.bf16.msra.mxu0 0
    %602 = vmatprep.subr.bf16.mxu0 0
    %603 = vmatpush1.bf16.msra.mxu0 0
    %604 = vmatprep.subr.bf16.mxu0 0
    %605 = vmatpush1.bf16.msra.mxu0 0
    %606 = vmatprep.subr.bf16.mxu0 0
    %607 = vmatpush1.bf16.msra.mxu0 0
    %608 = vmatprep.subr.bf16.mxu0 0
    %609 = vmatpush1.bf16.msra.mxu0 0
    %610 = vmatprep.subr.bf16.mxu0 0
    %611 = vmatpush1.bf16.msra.mxu0 0
    %612 = vmatprep.subr.bf16.mxu0 0
    %613 = vmatpush1.bf16.msra.mxu0 0
    %614 = vmatprep.subr.bf16.mxu0 0
    %615 = vmatpush1.bf16.msra.mxu0 0
    %616 = vmatprep.subr.bf16.mxu0 0
    %617 = vmatpush1.bf16.msra.mxu0 0
    %618 = vmatprep.subr.bf16.mxu0 0
    %619 = vmatpush1.bf16.msra.mxu0 0
    %620 = vmatprep.subr.bf16.mxu0 0
    %621 = vmatpush1.bf16.msra.mxu0 0
    %622 = vmatprep.mubr.bf16.mxu0 0
    %623 = vmatmul.mubr.bf16.gmra.mrb[0].mxu0 %v468
    %v624 = vpop.f32.mrb[0].mxu0
    %v625 = vadd.f32 %v585, %v624
    %v626 = vpop.f32.mrb[0].mxu0
    %v627 = vpop.f32.mrb[0].mxu0
    %v628 = vpop.f32.mrb[0].mxu0
    %629 = vdwg.mxu0
    %vm630 = vcmask 74752
    %631 = vst.msk [vmem:[#allocation2] sm:$0x3] %vm630, %v625
    // Predicated region
    $region14: #{tpu_custom_call.1} parent=1 // pred_check
      _
    $region15: #{tpu_custom_call.1} parent=1 // pred_check_branch
      %633 = sbr.rel (0) target = $region17
    $region16: #{tpu_custom_call.1} parent=1 // pred_region
      %s635 = ssub.s32 32, 32
      %636 = vsyncadd [#allocation3], %s635
      %s638 = sshll.u32 [#allocation2], 4
      %s639 = int_to_ptr.vmem [resolvable:$true] %s638
      %641 = dma.vmem_to_hbm [thread:$0]  %s639, 32, %s3, [#allocation3]
    $region17: #{tpu_custom_call.1} parent=1 // pred_fallthru
      _
    // Predicated region
    $region18: #{tpu_custom_call.1} parent=1 // pred_check
      _
    $region19: #{tpu_custom_call.1} parent=1 // pred_check_branch
      %643 = sbr.rel (0) target = $region21
    $region20: #{tpu_custom_call.1} parent=1 // pred_region
      %644 = dma.done [#allocation3], 32
    $region21: #{tpu_custom_call.1} parent=1 // pred_fallthru
      _
    %645 = vsyncpa [#allocation3], 1

</llo_original>
